<compile_context>
chip_gen: v7x
topology: tpu7x:2x2x1
jax: 0.10.0
libtpu: 0.0.40
codegen_flags: <defaults>
</compile_context>

<pallas_src>
import jax
import jax.numpy as jnp
from jax.experimental import pallas as pl
from jax.experimental.pallas import tpu as pltpu


def _make_kernel(total_batch: int, leaky_slope: float = 0.2, eps: float = 1e-5):
    inv_n = 1.0 / float(total_batch)

    def kernel(
        x_ref,       # (TILE_B, latent)
        w1_ref,      # (latent, hidden)
        gamma_ref,   # (1, hidden)   BatchNorm weight
        beta_ref,    # (1, hidden)   BatchNorm bias
        w2_ref,      # (hidden, n_pad)   lane-padded output Linear weight
        b2_ref,      # (1, n_pad)        lane-padded output Linear bias
        y_ref,       # (TILE_B, n_pad)
        sum_ref,     # (1, hidden)  VMEM scratch: running sum over batch
        sumsq_ref,   # (1, hidden)  VMEM scratch: running sum of squares
        scale_ref,   # (1, hidden)  VMEM scratch: folded BN scale
        shift_ref,   # (1, hidden)  VMEM scratch: folded BN shift
    ):
        phase = pl.program_id(0)
        tile = pl.program_id(1)

        @pl.when((phase == 0) & (tile == 0))
        def _init():
            sum_ref[...] = jnp.zeros_like(sum_ref)
            sumsq_ref[...] = jnp.zeros_like(sumsq_ref)

        # ---- phase 0: accumulate full-batch BN statistics ----
        @pl.when(phase == 0)
        def _stats():
            h = jnp.dot(x_ref[...], w1_ref[...],
                        preferred_element_type=jnp.float32)
            sum_ref[...] += jnp.sum(h, axis=0, keepdims=True)
            sumsq_ref[...] += jnp.sum(h * h, axis=0, keepdims=True)

        # ---- phase 1, first tile: fold stats into one (scale, shift) pair ----
        @pl.when((phase == 1) & (tile == 0))
        def _finalize():
            mean = sum_ref[...] * inv_n
            var = jnp.maximum(sumsq_ref[...] * inv_n - mean * mean, 0.0)
            scale = gamma_ref[...] * jax.lax.rsqrt(var + eps)
            scale_ref[...] = scale
            shift_ref[...] = beta_ref[...] - mean * scale

        # ---- phase 1: normalize + LeakyReLU + output Linear, lane-dense store ----
        @pl.when(phase == 1)
        def _emit():
            h = jnp.dot(x_ref[...], w1_ref[...],
                        preferred_element_type=jnp.float32)
            h = h * scale_ref[...] + shift_ref[...]
            h = jnp.where(h >= 0.0, h, leaky_slope * h)
            y = jnp.dot(h, w2_ref[...],
                        preferred_element_type=jnp.float32) + b2_ref[...]
            y_ref[...] = y.astype(y_ref.dtype)

    return kernel


def multi_fc_classifier(x, params, *, tile_b=256):
    """x: (B, latent_dim) -> (B, class_num), training-mode BatchNorm semantics."""
    w1, gamma, beta, w2, b2 = (
        params["w1"], params["gamma"], params["beta"], params["w2"], params["b2"],
    )
    # b1 is intentionally not passed: BN's mean subtraction cancels it exactly.
    B, latent = x.shape
    hidden = w1.shape[1]
    class_num = w2.shape[1]

    # Lane-dense output: pad class_num up to a multiple of 128.
    n_pad = max(128, ((class_num + 127) // 128) * 128)
    w2p = jnp.zeros((hidden, n_pad), w2.dtype).at[:, :class_num].set(w2)
    b2p = jnp.zeros((1, n_pad), b2.dtype).at[:, :class_num].set(b2)

    # Batch tile: multiple of 8 sublanes and a divisor of B, else one block.
    # TODO(synk): support ragged B via a masked last tile (mask rows out of the
    # BN statistics) instead of collapsing to a single block.
    if B % tile_b != 0 or tile_b % 8 != 0:
        tile_b = B
    n_tiles = B // tile_b

    kernel = _make_kernel(total_batch=B)

    bytes_x = 2 * B * latent * x.dtype.itemsize          # x read once per phase
    bytes_w = (w1.size + gamma.size + beta.size + w2p.size + b2p.size) * 4
    bytes_y = B * n_pad * 4                              # each output tile written once
    cost = pl.CostEstimate(
        flops=2 * (2 * B * latent * hidden) + 2 * B * hidden * n_pad,
        transcendentals=hidden,                          # one rsqrt vector
        bytes_accessed=bytes_x + bytes_w + bytes_y,
    )

    y_pad = pl.pallas_call(
        kernel,
        out_shape=jax.ShapeDtypeStruct((B, n_pad), jnp.float32),
        grid_spec=pltpu.PrefetchScalarGridSpec(
            num_scalar_prefetch=0,
            grid=(2, n_tiles),  # (phase, batch tile); phase is outermost
            in_specs=[
                pl.BlockSpec((tile_b, latent), lambda p, i: (i, 0)),   # x
                pl.BlockSpec((latent, hidden), lambda p, i: (0, 0)),   # w1 (resident)
                pl.BlockSpec((1, hidden), lambda p, i: (0, 0)),        # gamma
                pl.BlockSpec((1, hidden), lambda p, i: (0, 0)),        # beta
                pl.BlockSpec((hidden, n_pad), lambda p, i: (0, 0)),    # w2 (padded)
                pl.BlockSpec((1, n_pad), lambda p, i: (0, 0)),         # b2 (padded)
            ],
            # Phase 0 keeps the output block index pinned at 0 (no stale
            # writebacks); phase 1 walks the batch tiles and each tile is
            # written back to HBM exactly once.
            out_specs=pl.BlockSpec((tile_b, n_pad), lambda p, i: (p * i, 0)),
            scratch_shapes=[
                pltpu.VMEM((1, hidden), jnp.float32),   # sum
                pltpu.VMEM((1, hidden), jnp.float32),   # sum of squares
                pltpu.VMEM((1, hidden), jnp.float32),   # folded BN scale
                pltpu.VMEM((1, hidden), jnp.float32),   # folded BN shift
            ],
        ),
        compiler_params=pltpu.CompilerParams(
            # Both axes sequential: phase ordering + shared stats accumulator.
            dimension_semantics=("arbitrary", "arbitrary"),
        ),
        cost_estimate=cost,
    )(x, w1, gamma, beta, w2p, b2p)

    return y_pad[:, :class_num]


def init_params(key, latent_dim, class_dim_1, class_num):
    """Deterministic synthetic parameters (PyTorch shapes, stored transposed)."""
    k1, k2, k3, k4 = jax.random.split(key, 4)
    # Linear weights: PyTorch stores (out, in); we store (in, out) for x @ W.
    w1 = jax.random.normal(k1, (latent_dim, class_dim_1), jnp.float32) * 0.05
    b1 = jax.random.normal(k2, (1, class_dim_1), jnp.float32) * 0.05
    w2 = jax.random.normal(k3, (class_dim_1, class_num), jnp.float32) * 0.05
    b2 = jax.random.normal(k4, (1, class_num), jnp.float32) * 0.05
    # BatchNorm1d default init: weight = 1, bias = 0.
    gamma = jnp.ones((1, class_dim_1), jnp.float32)
    beta = jnp.zeros((1, class_dim_1), jnp.float32)
    return {"w1": w1, "b1": b1, "gamma": gamma, "beta": beta, "w2": w2, "b2": b2}


if __name__ == "__main__":
    # Module defaults: latent_dim=256, class_dim_1=128, class_num=2.
    # Small batch B=64 with TILE_B=32 still exercises the two-phase,
    # multi-tile grid (2 batch tiles per phase).
    B, LATENT_DIM, CLASS_DIM_1, CLASS_NUM = 64, 256, 128, 2
    TILE_B = 32

    key = jax.random.PRNGKey(0)
    kx, kp = jax.random.split(key)
    x = jax.random.normal(kx, (B, LATENT_DIM), jnp.float32)
    params = init_params(kp, LATENT_DIM, CLASS_DIM_1, CLASS_NUM)

    y = multi_fc_classifier(x, params, tile_b=TILE_B)
    jax.block_until_ready(y)

    # Pure-JAX reference of the full PyTorch math (INCLUDING b1, which the
    # kernel drops because training-mode BN cancels it exactly).
    h_ref = x @ params["w1"] + params["b1"]
    m = h_ref.mean(axis=0, keepdims=True)
    v = ((h_ref - m) ** 2).mean(axis=0, keepdims=True)
    h_ref = (h_ref - m) / jnp.sqrt(v + 1e-5) * params["gamma"] + params["beta"]
    h_ref = jnp.where(h_ref >= 0, h_ref, 0.2 * h_ref)
    y_ref = h_ref @ params["w2"] + params["b2"]

    assert y.shape == (B, CLASS_NUM)
    assert jnp.allclose(y, y_ref, atol=2e-3, rtol=2e-3), "mismatch vs reference"
    print("KERNEL_OK")
</pallas_src>

<mosaic_0001>
module attributes {stable_mosaic.version = 11 : i64} {
  func.func @kernel(%arg0: i32, %arg1: i32, %arg2: memref<32x256xf32, #tpu.memory_space<vmem>>, %arg3: memref<256x128xf32, #tpu.memory_space<vmem>>, %arg4: memref<1x128xf32, #tpu.memory_space<vmem>>, %arg5: memref<1x128xf32, #tpu.memory_space<vmem>>, %arg6: memref<128x128xf32, #tpu.memory_space<vmem>>, %arg7: memref<1x128xf32, #tpu.memory_space<vmem>>, %arg8: memref<32x128xf32, #tpu.memory_space<vmem>>, %arg9: memref<1x128xf32, #tpu.memory_space<vmem>>, %arg10: memref<1x128xf32, #tpu.memory_space<vmem>>, %arg11: memref<1x128xf32, #tpu.memory_space<vmem>>, %arg12: memref<1x128xf32, #tpu.memory_space<vmem>>) attributes {dimension_semantics = [#tpu.dimension_semantics<arbitrary>, #tpu.dimension_semantics<arbitrary>], iteration_bounds = array<i64: 2, 2>, scalar_prefetch = 0 : i64, scratch_operands = 4 : i64, tpu.core_type = #tpu.core_type<tc>, window_params = [{transform_indices = @transform_0, window_bounds = array<i64: 32, 256>}, {pipeline_mode = #tpu.pipeline_mode<synchronous>, transform_indices = @transform_1, window_bounds = array<i64: 256, 128>}, {pipeline_mode = #tpu.pipeline_mode<synchronous>, transform_indices = @transform_2, window_bounds = array<i64: 1, 128>}, {pipeline_mode = #tpu.pipeline_mode<synchronous>, transform_indices = @transform_3, window_bounds = array<i64: 1, 128>}, {pipeline_mode = #tpu.pipeline_mode<synchronous>, transform_indices = @transform_4, window_bounds = array<i64: 128, 128>}, {pipeline_mode = #tpu.pipeline_mode<synchronous>, transform_indices = @transform_5, window_bounds = array<i64: 1, 128>}, {transform_indices = @transform_6, window_bounds = array<i64: 32, 128>}]} {
    %c0_i32 = arith.constant 0 : i32
    %0 = arith.cmpi eq, %arg0, %c0_i32 : i32
    %c0_i32_0 = arith.constant 0 : i32
    %1 = arith.cmpi eq, %arg1, %c0_i32_0 : i32
    %2 = arith.andi %0, %1 : i1
    %3 = arith.extui %2 : i1 to i32
    %c0_i32_1 = arith.constant 0 : i32
    %4 = arith.cmpi ne, %3, %c0_i32_1 : i32
    scf.if %4 {
      %cst = arith.constant 0.000000e+00 : f32
      %16 = vector.broadcast %cst : f32 to vector<1x128xf32>
      %c0 = arith.constant 0 : index
      %c0_8 = arith.constant 0 : index
      %17 = vector.load %arg9[%c0, %c0_8] : memref<1x128xf32, #tpu.memory_space<vmem>>, vector<1x128xf32>
      tpu.vector_store %arg9[%c0, %c0_8], %16 {strides = array<i32>} : memref<1x128xf32, #tpu.memory_space<vmem>>, vector<1x128xf32>,
      %cst_9 = arith.constant 0.000000e+00 : f32
      %18 = vector.broadcast %cst_9 : f32 to vector<1x128xf32>
      %c0_10 = arith.constant 0 : index
      %c0_11 = arith.constant 0 : index
      %19 = vector.load %arg10[%c0_10, %c0_11] : memref<1x128xf32, #tpu.memory_space<vmem>>, vector<1x128xf32>
      tpu.vector_store %arg10[%c0_10, %c0_11], %18 {strides = array<i32>} : memref<1x128xf32, #tpu.memory_space<vmem>>, vector<1x128xf32>,
    } else {
    }
    %c0_i32_2 = arith.constant 0 : i32
    %5 = arith.cmpi eq, %arg0, %c0_i32_2 : i32
    %6 = arith.extui %5 : i1 to i32
    %c0_i32_3 = arith.constant 0 : i32
    %7 = arith.cmpi ne, %6, %c0_i32_3 : i32
    scf.if %7 {
      %c0 = arith.constant 0 : index
      %c0_8 = arith.constant 0 : index
      %16 = vector.load %arg2[%c0, %c0_8] : memref<32x256xf32, #tpu.memory_space<vmem>>, vector<32x256xf32>
      %c0_9 = arith.constant 0 : index
      %c0_10 = arith.constant 0 : index
      %17 = vector.load %arg3[%c0_9, %c0_10] : memref<256x128xf32, #tpu.memory_space<vmem>>, vector<256x128xf32>
      %cst = arith.constant dense<0.000000e+00> : vector<32x128xf32>
      %18 = tpu.matmul %16, %17, %cst {dimension_numbers = #tpu.dot_dimension_numbers<[1], [0], [0], [1], [0, 0, 1, 1], [], []>} : vector<32x256xf32>, vector<256x128xf32>, vector<32x128xf32> -> vector<32x128xf32>
      %c0_11 = arith.constant 0 : index
      %c0_12 = arith.constant 0 : index
      %19 = vector.load %arg9[%c0_11, %c0_12] : memref<1x128xf32, #tpu.memory_space<vmem>>, vector<1x128xf32>
      %cst_13 = arith.constant dense<0.000000e+00> : vector<128xf32>
      %20 = vector.multi_reduction <add>, %18, %cst_13 [0] : vector<32x128xf32> to vector<128xf32>
      %21 = vector.shape_cast %20 : vector<128xf32> to vector<1x128xf32>
      %22 = arith.addf %19, %21 : vector<1x128xf32>
      %c0_14 = arith.constant 0 : index
      %c0_15 = arith.constant 0 : index
      %23 = vector.load %arg9[%c0_14, %c0_15] : memref<1x128xf32, #tpu.memory_space<vmem>>, vector<1x128xf32>
      tpu.vector_store %arg9[%c0_14, %c0_15], %22 {strides = array<i32>} : memref<1x128xf32, #tpu.memory_space<vmem>>, vector<1x128xf32>,
      %c0_16 = arith.constant 0 : index
      %c0_17 = arith.constant 0 : index
      %24 = vector.load %arg10[%c0_16, %c0_17] : memref<1x128xf32, #tpu.memory_space<vmem>>, vector<1x128xf32>
      %25 = arith.mulf %18, %18 : vector<32x128xf32>
      %cst_18 = arith.constant dense<0.000000e+00> : vector<128xf32>
      %26 = vector.multi_reduction <add>, %25, %cst_18 [0] : vector<32x128xf32> to vector<128xf32>
      %27 = vector.shape_cast %26 : vector<128xf32> to vector<1x128xf32>
      %28 = arith.addf %24, %27 : vector<1x128xf32>
      %c0_19 = arith.constant 0 : index
      %c0_20 = arith.constant 0 : index
      %29 = vector.load %arg10[%c0_19, %c0_20] : memref<1x128xf32, #tpu.memory_space<vmem>>, vector<1x128xf32>
      tpu.vector_store %arg10[%c0_19, %c0_20], %28 {strides = array<i32>} : memref<1x128xf32, #tpu.memory_space<vmem>>, vector<1x128xf32>,
    } else {
    }
    %c1_i32 = arith.constant 1 : i32
    %8 = arith.cmpi eq, %arg0, %c1_i32 : i32
    %c0_i32_4 = arith.constant 0 : i32
    %9 = arith.cmpi eq, %arg1, %c0_i32_4 : i32
    %10 = arith.andi %8, %9 : i1
    %11 = arith.extui %10 : i1 to i32
    %c0_i32_5 = arith.constant 0 : i32
    %12 = arith.cmpi ne, %11, %c0_i32_5 : i32
    scf.if %12 {
      %c0 = arith.constant 0 : index
      %c0_8 = arith.constant 0 : index
      %16 = vector.load %arg9[%c0, %c0_8] : memref<1x128xf32, #tpu.memory_space<vmem>>, vector<1x128xf32>
      %cst = arith.constant 1.562500e-02 : f32
      %17 = vector.broadcast %cst : f32 to vector<1x128xf32>
      %18 = arith.mulf %16, %17 : vector<1x128xf32>
      %c0_9 = arith.constant 0 : index
      %c0_10 = arith.constant 0 : index
      %19 = vector.load %arg10[%c0_9, %c0_10] : memref<1x128xf32, #tpu.memory_space<vmem>>, vector<1x128xf32>
      %cst_11 = arith.constant 1.562500e-02 : f32
      %20 = vector.broadcast %cst_11 : f32 to vector<1x128xf32>
      %21 = arith.mulf %19, %20 : vector<1x128xf32>
      %22 = arith.mulf %18, %18 : vector<1x128xf32>
      %23 = arith.subf %21, %22 : vector<1x128xf32>
      %cst_12 = arith.constant 0.000000e+00 : f32
      %24 = vector.broadcast %cst_12 : f32 to vector<1x128xf32>
      %25 = arith.maximumf %23, %24 : vector<1x128xf32>
      %c0_13 = arith.constant 0 : index
      %c0_14 = arith.constant 0 : index
      %26 = vector.load %arg4[%c0_13, %c0_14] : memref<1x128xf32, #tpu.memory_space<vmem>>, vector<1x128xf32>
      %cst_15 = arith.constant 9.99999974E-6 : f32
      %27 = vector.broadcast %cst_15 : f32 to vector<1x128xf32>
      %28 = arith.addf %25, %27 : vector<1x128xf32>
      %29 = math.rsqrt %28 : vector<1x128xf32>
      %30 = arith.mulf %26, %29 : vector<1x128xf32>
      %c0_16 = arith.constant 0 : index
      %c0_17 = arith.constant 0 : index
      %31 = vector.load %arg11[%c0_16, %c0_17] : memref<1x128xf32, #tpu.memory_space<vmem>>, vector<1x128xf32>
      tpu.vector_store %arg11[%c0_16, %c0_17], %30 {strides = array<i32>} : memref<1x128xf32, #tpu.memory_space<vmem>>, vector<1x128xf32>,
      %c0_18 = arith.constant 0 : index
      %c0_19 = arith.constant 0 : index
      %32 = vector.load %arg5[%c0_18, %c0_19] : memref<1x128xf32, #tpu.memory_space<vmem>>, vector<1x128xf32>
      %33 = arith.mulf %18, %30 : vector<1x128xf32>
      %34 = arith.subf %32, %33 : vector<1x128xf32>
      %c0_20 = arith.constant 0 : index
      %c0_21 = arith.constant 0 : index
      %35 = vector.load %arg12[%c0_20, %c0_21] : memref<1x128xf32, #tpu.memory_space<vmem>>, vector<1x128xf32>
      tpu.vector_store %arg12[%c0_20, %c0_21], %34 {strides = array<i32>} : memref<1x128xf32, #tpu.memory_space<vmem>>, vector<1x128xf32>,
    } else {
    }
    %c1_i32_6 = arith.constant 1 : i32
    %13 = arith.cmpi eq, %arg0, %c1_i32_6 : i32
    %14 = arith.extui %13 : i1 to i32
    %c0_i32_7 = arith.constant 0 : i32
    %15 = arith.cmpi ne, %14, %c0_i32_7 : i32
    scf.if %15 {
      %c0 = arith.constant 0 : index
      %c0_8 = arith.constant 0 : index
      %16 = vector.load %arg2[%c0, %c0_8] : memref<32x256xf32, #tpu.memory_space<vmem>>, vector<32x256xf32>
      %c0_9 = arith.constant 0 : index
      %c0_10 = arith.constant 0 : index
      %17 = vector.load %arg3[%c0_9, %c0_10] : memref<256x128xf32, #tpu.memory_space<vmem>>, vector<256x128xf32>
      %cst = arith.constant dense<0.000000e+00> : vector<32x128xf32>
      %18 = tpu.matmul %16, %17, %cst {dimension_numbers = #tpu.dot_dimension_numbers<[1], [0], [0], [1], [0, 0, 1, 1], [], []>} : vector<32x256xf32>, vector<256x128xf32>, vector<32x128xf32> -> vector<32x128xf32>
      %c0_11 = arith.constant 0 : index
      %c0_12 = arith.constant 0 : index
      %19 = vector.load %arg11[%c0_11, %c0_12] : memref<1x128xf32, #tpu.memory_space<vmem>>, vector<1x128xf32>
      %20 = vector.broadcast %19 : vector<1x128xf32> to vector<32x128xf32>
      %21 = arith.mulf %18, %20 : vector<32x128xf32>
      %c0_13 = arith.constant 0 : index
      %c0_14 = arith.constant 0 : index
      %22 = vector.load %arg12[%c0_13, %c0_14] : memref<1x128xf32, #tpu.memory_space<vmem>>, vector<1x128xf32>
      %23 = vector.broadcast %22 : vector<1x128xf32> to vector<32x128xf32>
      %24 = arith.addf %21, %23 : vector<32x128xf32>
      %cst_15 = arith.constant 0.000000e+00 : f32
      %25 = vector.broadcast %cst_15 : f32 to vector<32x128xf32>
      %26 = arith.cmpf oge, %24, %25 : vector<32x128xf32>
      %cst_16 = arith.constant 2.000000e-01 : f32
      %27 = vector.broadcast %cst_16 : f32 to vector<32x128xf32>
      %28 = arith.mulf %27, %24 : vector<32x128xf32>
      %29 = arith.select %26, %24, %28 : vector<32x128xi1>, vector<32x128xf32>
      %c0_17 = arith.constant 0 : index
      %c0_18 = arith.constant 0 : index
      %30 = vector.load %arg6[%c0_17, %c0_18] : memref<128x128xf32, #tpu.memory_space<vmem>>, vector<128x128xf32>
      %cst_19 = arith.constant dense<0.000000e+00> : vector<32x128xf32>
      %31 = tpu.matmul %29, %30, %cst_19 {dimension_numbers = #tpu.dot_dimension_numbers<[1], [0], [0], [1], [0, 0, 1, 1], [], []>} : vector<32x128xf32>, vector<128x128xf32>, vector<32x128xf32> -> vector<32x128xf32>
      %c0_20 = arith.constant 0 : index
      %c0_21 = arith.constant 0 : index
      %32 = vector.load %arg7[%c0_20, %c0_21] : memref<1x128xf32, #tpu.memory_space<vmem>>, vector<1x128xf32>
      %33 = vector.broadcast %32 : vector<1x128xf32> to vector<32x128xf32>
      %34 = arith.addf %31, %33 : vector<32x128xf32>
      %c0_22 = arith.constant 0 : index
      %c0_23 = arith.constant 0 : index
      %35 = vector.load %arg8[%c0_22, %c0_23] : memref<32x128xf32, #tpu.memory_space<vmem>>, vector<32x128xf32>
      tpu.vector_store %arg8[%c0_22, %c0_23], %34 {strides = array<i32>} : memref<32x128xf32, #tpu.memory_space<vmem>>, vector<32x128xf32>,
    } else {
    }
    return
  }
  func.func @transform_0(%arg0: i32, %arg1: i32) -> (i32, i32) {
    %c0_i32 = arith.constant 0 : i32
    %c0_i32_0 = arith.constant 0 : i32
    return %arg1, %c0_i32 : i32, i32
  }
  func.func @transform_1(%arg0: i32, %arg1: i32) -> (i32, i32) {
    %c0_i32 = arith.constant 0 : i32
    %c0_i32_0 = arith.constant 0 : i32
    %c0_i32_1 = arith.constant 0 : i32
    return %c0_i32, %c0_i32_0 : i32, i32
  }
  func.func @transform_2(%arg0: i32, %arg1: i32) -> (i32, i32) {
    %c0_i32 = arith.constant 0 : i32
    %c0_i32_0 = arith.constant 0 : i32
    %c0_i32_1 = arith.constant 0 : i32
    return %c0_i32, %c0_i32_0 : i32, i32
  }
  func.func @transform_3(%arg0: i32, %arg1: i32) -> (i32, i32) {
    %c0_i32 = arith.constant 0 : i32
    %c0_i32_0 = arith.constant 0 : i32
    %c0_i32_1 = arith.constant 0 : i32
    return %c0_i32, %c0_i32_0 : i32, i32
  }
  func.func @transform_4(%arg0: i32, %arg1: i32) -> (i32, i32) {
    %c0_i32 = arith.constant 0 : i32
    %c0_i32_0 = arith.constant 0 : i32
    %c0_i32_1 = arith.constant 0 : i32
    return %c0_i32, %c0_i32_0 : i32, i32
  }
  func.func @transform_5(%arg0: i32, %arg1: i32) -> (i32, i32) {
    %c0_i32 = arith.constant 0 : i32
    %c0_i32_0 = arith.constant 0 : i32
    %c0_i32_1 = arith.constant 0 : i32
    return %c0_i32, %c0_i32_0 : i32, i32
  }
  func.func @transform_6(%arg0: i32, %arg1: i32) -> (i32, i32) {
    %0 = arith.muli %arg0, %arg1 : i32
    %c0_i32 = arith.constant 0 : i32
    %c0_i32_0 = arith.constant 0 : i32
    return %0, %c0_i32 : i32, i32
  }
}

</mosaic_0001>

<llo_original>
// kernel: tpu_custom_call.1
$region0: #{tpu_custom_call.1}
  #allocation0 [shape = 'u32[]', space=smem, size = 0x4, offset = 0x4, fixed_abs, tag = 'smem constant byte address 0x4 - core index']
  #allocation1 [shape = 'u32[144,128]{1,0:T(1,128)}', space=vmem, size = 0x12000, scoped, tag = 'internal scratch']
  #allocation2 [shape = 'f32[1,128]{1,0:T(1,128)}', space=vmem, size = 0x200, scoped, tag = 'scratch operand']
  #allocation3 [shape = 'f32[1,128]{1,0:T(1,128)}', space=vmem, size = 0x200, scoped, tag = 'scratch operand']
  #allocation4 [shape = 'f32[1,128]{1,0:T(1,128)}', space=vmem, size = 0x200, scoped, tag = 'scratch operand']
  #allocation5 [shape = 'f32[1,128]{1,0:T(1,128)}', space=vmem, size = 0x200, scoped, tag = 'scratch operand']
  %s0 = inlined_call_operand.hbm [shape: f32[64,256], index: 0, kind: input, shape index: {}]
  %s1 = inlined_call_operand.hbm [shape: f32[256,128], index: 1, kind: input, shape index: {}]
  %s2 = inlined_call_operand.vmem [shape: f32[1,128], index: 2, kind: input, shape index: {}]
  %s3 = inlined_call_operand.vmem [shape: f32[1,128], index: 3, kind: input, shape index: {}]
  %s4 = inlined_call_operand.hbm [shape: f32[128,128], index: 4, kind: input, shape index: {}]
  %s5 = inlined_call_operand.vmem [shape: f32[1,128], index: 5, kind: input, shape index: {}]
  %s6 = inlined_call_operand.hbm [shape: f32[64,128], index: 6, kind: output, shape index: {}]
  %s7 = sld [smem:[#allocation0]]
  $region85: #{tpu_custom_call.1} parent=0
    _
  %s9 = ssub.s32 1, %s7
  %s10 = scalar_select 0, %s9, %s7
  $region1: #{tpu_custom_call.1} parent=0
    #allocation6 [shape = 'u8[65536]{0}', space=vmem, size = 0x10000, scoped, tag = 'input window, operand 0']
    #allocation7 [shape = 's32[2]{0}', space=sflag, size = 0x8, scoped, tag = 'scoped memory for tpu_custom_call.1']
    #allocation8 [shape = 's32[2]{0}', space=sflag, size = 0x8, scoped, tag = 'scoped memory for tpu_custom_call.1']
    #allocation9 [shape = 'u8[131072]{0}', space=vmem, size = 0x20000, scoped, tag = 'input window, operand 1, single buffered']
    #allocation10 [shape = 's32[1]{0}', space=sflag, size = 0x4, scoped, tag = 'scoped memory for tpu_custom_call.1']
    #allocation11 [shape = 'u8[65536]{0}', space=vmem, size = 0x10000, scoped, tag = 'input window, operand 4, single buffered']
    #allocation12 [shape = 'u8[32768]{0}', space=vmem, size = 0x8000, scoped, tag = 'output window, operand 0']
    %11 = vsyncpa [#allocation7], 0
    %s12 = scalar_lea.sflag [#allocation7], 1
    %13 = vsyncpa %s12, 0
    %14 = vsyncpa [#allocation10], 0
    %15 = vsyncpa [#allocation8], 0
    %s16 = scalar_lea.sflag [#allocation8], 1
    %17 = vsyncpa %s16, 0
    loop: start=0, step=1, limit=6
    $region2: #{tpu_custom_call.1} parent=1 // loop_pre_header
      _
    $region3: #{tpu_custom_call.1} parent=1 // loop_header
      %s19 = sphi 0, %s23
      %p20 = scmp.ge.s32.totalorder %s19, 6
      %s26 = sphi 0, %s38
      %s27 = sphi 0, %s34
      %s28 = sphi 0, %s26
      %s29 = sphi 0, %s27
      %s30 = sphi 0, %s28
      %s31 = sphi 0, %s29
      %s41 = sphi 0, %s43
      %s44 = sphi 0, %s41
      %s45 = sphi 0, %s44
      %s61 = sphi 0, %s45
      %s65 = sphi 0, %s65
      %s67 = sphi 0, %s65
      %s68 = sphi 0, %s67
      %s82 = sphi 0, %s68
      %s86 = sphi 0, %s86
      %s88 = sphi 0, %s86
      %s89 = sphi 0, %s88
      %s103 = sphi 0, %s89
      %s107 = sphi 0, %s107
      %s109 = sphi 0, %s107
      %s110 = sphi 0, %s109
      %s124 = sphi 0, %s110
      %s128 = sphi 0, %s128
      %s130 = sphi 0, %s128
      %s131 = sphi 0, %s130
      %s145 = sphi 0, %s131
      %s149 = sphi 0, %s149
      %s151 = sphi 0, %s149
      %s152 = sphi 0, %s151
      %s166 = sphi 0, %s152
      %s174 = sphi 0, %s176
      %s177 = sphi 0, %s174
      %s178 = sphi 0, %s177
      %s194 = sphi 0, %s178
    $region4: #{tpu_custom_call.1} parent=1 // loop_header_branch
      %22 = sbr.rel (%p20) target = $region8
    $region5: #{tpu_custom_call.1} parent=1 // loop_body
      %s24 = ssub.s32 %s19, 1
      %s25 = ssub.s32 %s19, 2
      %s32 = sadd.s32 1, %s27
      %p33 = scmp.ge.s32.totalorder %s32, 2
      %s34 = scalar_select %p33, 0, %s32
      %s35 = sadd.s32 1, %s26
      %s36 = scalar_select %p33, %s35, %s26
      %p37 = scmp.ge.s32.totalorder %s36, 2
      %s38 = scalar_select %p37, 0, %s36
      %s39 = ssub.s32 %s27, %s34
      %p40 = scmp.eq.s32.totalorder %s39, 0
      %s42 = sadd.s32 %s41, 1
      %s43 = scalar_select %p40, %s41, %s42
      %p46 = pneg %p40
      %p47 = scmp.eq.s32.totalorder %s19, 3
      %p48 = por %p46, %p47
      %p49 = scmp.ne.s32.totalorder %s41, %s44
      %p50 = scmp.eq.s32.totalorder %s19, 0
      %p51 = por %p49, %p50
      %p52 = scmp.ne.s32.totalorder %s41, %s44
      %p53 = scmp.eq.s32.totalorder %s24, 3
      %p54 = por %p52, %p53
      %p55 = scmp.ne.s32.totalorder %s44, %s45
      %p56 = scmp.eq.s32.totalorder %s24, 0
      %p57 = por %p55, %p56
      %p58 = scmp.ne.s32.totalorder %s44, %s45
      %p59 = scmp.eq.s32.totalorder %s25, 3
      %p60 = por %p58, %p59
      %p62 = scmp.ne.s32.totalorder %s45, %s61
      %p63 = scmp.eq.s32.totalorder %s25, 0
      %p64 = por %p62, %p63
      %s66 = sadd.s32 %s65, 1
      %p69 = scmp.eq.s32.totalorder %s19, 3
      %p70 = scmp.ne.s32.totalorder %s65, %s67
      %p71 = scmp.eq.s32.totalorder %s19, 0
      %p72 = por %p70, %p71
      %p73 = scmp.ne.s32.totalorder %s65, %s67
      %p74 = scmp.eq.s32.totalorder %s24, 3
      %p75 = por %p73, %p74
      %p76 = scmp.ne.s32.totalorder %s67, %s68
      %p77 = scmp.eq.s32.totalorder %s24, 0
      %p78 = por %p76, %p77
      %p79 = scmp.ne.s32.totalorder %s67, %s68
      %p80 = scmp.eq.s32.totalorder %s25, 3
      %p81 = por %p79, %p80
      %p83 = scmp.ne.s32.totalorder %s68, %s82
      %p84 = scmp.eq.s32.totalorder %s25, 0
      %p85 = por %p83, %p84
      %s87 = sadd.s32 %s86, 1
      %p90 = scmp.eq.s32.totalorder %s19, 3
      %p91 = scmp.ne.s32.totalorder %s86, %s88
      %p92 = scmp.eq.s32.totalorder %s19, 0
      %p93 = por %p91, %p92
      %p94 = scmp.ne.s32.totalorder %s86, %s88
      %p95 = scmp.eq.s32.totalorder %s24, 3
      %p96 = por %p94, %p95
      %p97 = scmp.ne.s32.totalorder %s88, %s89
      %p98 = scmp.eq.s32.totalorder %s24, 0
      %p99 = por %p97, %p98
      %p100 = scmp.ne.s32.totalorder %s88, %s89
      %p101 = scmp.eq.s32.totalorder %s25, 3
      %p102 = por %p100, %p101
      %p104 = scmp.ne.s32.totalorder %s89, %s103
      %p105 = scmp.eq.s32.totalorder %s25, 0
      %p106 = por %p104, %p105
      %s108 = sadd.s32 %s107, 1
      %p111 = scmp.eq.s32.totalorder %s19, 3
      %p112 = scmp.ne.s32.totalorder %s107, %s109
      %p113 = scmp.eq.s32.totalorder %s19, 0
      %p114 = por %p112, %p113
      %p115 = scmp.ne.s32.totalorder %s107, %s109
      %p116 = scmp.eq.s32.totalorder %s24, 3
      %p117 = por %p115, %p116
      %p118 = scmp.ne.s32.totalorder %s109, %s110
      %p119 = scmp.eq.s32.totalorder %s24, 0
      %p120 = por %p118, %p119
      %p121 = scmp.ne.s32.totalorder %s109, %s110
      %p122 = scmp.eq.s32.totalorder %s25, 3
      %p123 = por %p121, %p122
      %p125 = scmp.ne.s32.totalorder %s110, %s124
      %p126 = scmp.eq.s32.totalorder %s25, 0
      %p127 = por %p125, %p126
      %s129 = sadd.s32 %s128, 1
      %p132 = scmp.eq.s32.totalorder %s19, 3
      %p133 = scmp.ne.s32.totalorder %s128, %s130
      %p134 = scmp.eq.s32.totalorder %s19, 0
      %p135 = por %p133, %p134
      %p136 = scmp.ne.s32.totalorder %s128, %s130
      %p137 = scmp.eq.s32.totalorder %s24, 3
      %p138 = por %p136, %p137
      %p139 = scmp.ne.s32.totalorder %s130, %s131
      %p140 = scmp.eq.s32.totalorder %s24, 0
      %p141 = por %p139, %p140
      %p142 = scmp.ne.s32.totalorder %s130, %s131
      %p143 = scmp.eq.s32.totalorder %s25, 3
      %p144 = por %p142, %p143
      %p146 = scmp.ne.s32.totalorder %s131, %s145
      %p147 = scmp.eq.s32.totalorder %s25, 0
      %p148 = por %p146, %p147
      %s150 = sadd.s32 %s149, 1
      %p153 = scmp.eq.s32.totalorder %s19, 3
      %p154 = scmp.ne.s32.totalorder %s149, %s151
      %p155 = scmp.eq.s32.totalorder %s19, 0
      %p156 = por %p154, %p155
      %p157 = scmp.ne.s32.totalorder %s149, %s151
      %p158 = scmp.eq.s32.totalorder %s24, 3
      %p159 = por %p157, %p158
      %p160 = scmp.ne.s32.totalorder %s151, %s152
      %p161 = scmp.eq.s32.totalorder %s24, 0
      %p162 = por %p160, %p161
      %p163 = scmp.ne.s32.totalorder %s151, %s152
      %p164 = scmp.eq.s32.totalorder %s25, 3
      %p165 = por %p163, %p164
      %p167 = scmp.ne.s32.totalorder %s152, %s166
      %p168 = scmp.eq.s32.totalorder %s25, 0
      %p169 = por %p167, %p168
      %s170 = smul.u32 %s26, %s27
      %s171 = smul.u32 %s38, %s34
      %s172 = ssub.s32 %s170, %s171
      %p173 = scmp.eq.s32.totalorder %s172, 0
      %s175 = sadd.s32 %s174, 1
      %s176 = scalar_select %p173, %s174, %s175
      %p179 = pneg %p173
      %p180 = scmp.eq.s32.totalorder %s19, 3
      %p181 = por %p179, %p180
      %p182 = scmp.ne.s32.totalorder %s174, %s177
      %p183 = scmp.eq.s32.totalorder %s19, 0
      %p184 = por %p182, %p183
      %p185 = scmp.ne.s32.totalorder %s174, %s177
      %p186 = scmp.eq.s32.totalorder %s24, 3
      %p187 = por %p185, %p186
      %p188 = scmp.ne.s32.totalorder %s177, %s178
      %p189 = scmp.eq.s32.totalorder %s24, 0
      %p190 = por %p188, %p189
      %p191 = scmp.ne.s32.totalorder %s177, %s178
      %p192 = scmp.eq.s32.totalorder %s25, 3
      %p193 = por %p191, %p192
      %p195 = scmp.ne.s32.totalorder %s178, %s194
      %p196 = scmp.eq.s32.totalorder %s25, 0
      %p197 = por %p195, %p196
      %p198 = scmp.le.s32.totalorder 1, %s19
      %p199 = scmp.lt.s32.totalorder %s19, 5
      %p200 = pnand %p198, %p199
      %p201 = pneg %p200
      // Predicated region
      $region9: #{tpu_custom_call.1} parent=5 // pred_check
        _
      $region10: #{tpu_custom_call.1} parent=5 // pred_check_branch
        %203 = sbr.rel (%p200) target = $region12
      $region11: #{tpu_custom_call.1} parent=5 // pred_region
        %s204 = ssub.s32 %s19, 1
        // Predicated region
        $region13: #{tpu_custom_call.1} parent=11 // pred_check
          %p205 = pneg %p78
        $region14: #{tpu_custom_call.1} parent=11 // pred_check_branch
          %207 = sbr.rel (%p205) target = $region16
        $region15: #{tpu_custom_call.1} parent=11 // pred_region
          %s209 = ssub.s32 4096, 4096
          %210 = vsyncadd [#allocation10], %s209
          %s211 = sshll.u32 [#allocation9], 4
          %s212 = int_to_ptr.vmem [resolvable:$true] %s211
          %217 = dma.hbm_to_vmem [thread:$0]  %s1, 4096, %s212, [#allocation10], 128, 128, 8
        $region16: #{tpu_custom_call.1} parent=11 // pred_fallthru
          _
        // Predicated region
        $region17: #{tpu_custom_call.1} parent=11 // pred_check
          %p218 = pneg %p99
        $region18: #{tpu_custom_call.1} parent=11 // pred_check_branch
          %220 = sbr.rel (%p218) target = $region20
        $region19: #{tpu_custom_call.1} parent=11 // pred_region
          _
        $region20: #{tpu_custom_call.1} parent=11 // pred_fallthru
          _
        // Predicated region
        $region21: #{tpu_custom_call.1} parent=11 // pred_check
          %p221 = pneg %p120
        $region22: #{tpu_custom_call.1} parent=11 // pred_check_branch
          %223 = sbr.rel (%p221) target = $region24
        $region23: #{tpu_custom_call.1} parent=11 // pred_region
          _
        $region24: #{tpu_custom_call.1} parent=11 // pred_fallthru
          _
        // Predicated region
        $region25: #{tpu_custom_call.1} parent=11 // pred_check
          %p224 = pneg %p141
        $region26: #{tpu_custom_call.1} parent=11 // pred_check_branch
          %226 = sbr.rel (%p224) target = $region28
        $region27: #{tpu_custom_call.1} parent=11 // pred_region
          %s228 = ssub.s32 2048, 2048
          %229 = vsyncadd [#allocation10], %s228
          %s230 = sshll.u32 [#allocation11], 4
          %s231 = int_to_ptr.vmem [resolvable:$true] %s230
          %236 = dma.hbm_to_vmem [thread:$0]  %s4, 2048, %s231, [#allocation10], 128, 128, 8
        $region28: #{tpu_custom_call.1} parent=11 // pred_fallthru
          _
        // Predicated region
        $region29: #{tpu_custom_call.1} parent=11 // pred_check
          %p237 = pneg %p162
        $region30: #{tpu_custom_call.1} parent=11 // pred_check_branch
          %239 = sbr.rel (%p237) target = $region32
        $region31: #{tpu_custom_call.1} parent=11 // pred_region
          _
        $region32: #{tpu_custom_call.1} parent=11 // pred_fallthru
          _
      $region12: #{tpu_custom_call.1} parent=5 // pred_fallthru
        _
      %p240 = scmp.lt.s32.totalorder %s19, 4
      // Predicated region
      $region33: #{tpu_custom_call.1} parent=5 // pred_check
        %p241 = pneg %p240
      $region34: #{tpu_custom_call.1} parent=5 // pred_check_branch
        %243 = sbr.rel (%p241) target = $region36
      $region35: #{tpu_custom_call.1} parent=5 // pred_region
        // Predicated region
        $region37: #{tpu_custom_call.1} parent=35 // pred_check
          %p244 = pneg %p51
        $region38: #{tpu_custom_call.1} parent=35 // pred_check_branch
          %246 = sbr.rel (%p244) target = $region40
        $region39: #{tpu_custom_call.1} parent=35 // pred_region
          %s247 = sand.u32 %s41, 1
          %s248 = scalar_lea.sflag [#allocation7], %s247
          %s249 = sand.u32 %s41, 1
          %s250 = smul.addr %s249, 64
          %s251 = scalar_lea.vmem [#allocation6], %s250
          %s252 = smul.u32 4, %s27
          %s254 = ssub.s32 1024, 1024
          %255 = vsyncadd %s248, %s254
          %s256 = smul.addr %s252, 2
          %s257 = smul.addr %s256, 128
          %s258 = scalar_lea.hbm %s0, %s257
          %s259 = sshll.u32 %s251, 4
          %s260 = int_to_ptr.vmem [resolvable:$true] %s259
          %265 = dma.hbm_to_vmem [thread:$0]  %s258, 1024, %s260, %s248, 256, 256, 16
        $region40: #{tpu_custom_call.1} parent=35 // pred_fallthru
          _
      $region36: #{tpu_custom_call.1} parent=5 // pred_fallthru
        _
      %p266 = scmp.le.s32.totalorder 1, %s19
      %p267 = scmp.lt.s32.totalorder %s19, 5
      %p268 = pnand %p266, %p267
      %p269 = pneg %p268
      // Predicated region
      $region41: #{tpu_custom_call.1} parent=5 // pred_check
        _
      $region42: #{tpu_custom_call.1} parent=5 // pred_check_branch
        %271 = sbr.rel (%p268) target = $region44
      $region43: #{tpu_custom_call.1} parent=5 // pred_region
        %s272 = ssub.s32 %s19, 1
        %s273 = sand.u32 %s44, 1
        %s274 = scalar_lea.sflag [#allocation7], %s273
        %s275 = sand.u32 %s44, 1
        %s276 = smul.addr %s275, 64
        %s277 = scalar_lea.vmem [#allocation6], %s276
        // Predicated region
        $region45: #{tpu_custom_call.1} parent=43 // pred_check
          %p278 = pneg %p57
        $region46: #{tpu_custom_call.1} parent=43 // pred_check_branch
          %280 = sbr.rel (%p278) target = $region48
        $region47: #{tpu_custom_call.1} parent=43 // pred_region
          %281 = dma.done %s274, 1024
        $region48: #{tpu_custom_call.1} parent=43 // pred_fallthru
          _
        // Predicated region
        $region49: #{tpu_custom_call.1} parent=43 // pred_check
          %p282 = pneg %p78
        $region50: #{tpu_custom_call.1} parent=43 // pred_check_branch
          %284 = sbr.rel (%p282) target = $region52
        $region51: #{tpu_custom_call.1} parent=43 // pred_region
          %285 = dma.done [#allocation10], 4096
        $region52: #{tpu_custom_call.1} parent=43 // pred_fallthru
          _
        // Predicated region
        $region53: #{tpu_custom_call.1} parent=43 // pred_check
          %p286 = pneg %p141
        $region54: #{tpu_custom_call.1} parent=43 // pred_check_branch
          %288 = sbr.rel (%p286) target = $region56
        $region55: #{tpu_custom_call.1} parent=43 // pred_region
          %289 = dma.done [#allocation10], 2048
        $region56: #{tpu_custom_call.1} parent=43 // pred_fallthru
          _
        %s290 = sand.u32 %s44, 1
        %s291 = scalar_lea.sflag [#allocation7], %s290
        %s292 = sand.u32 %s44, 1
        %s293 = smul.addr %s292, 64
        %s294 = scalar_lea.vmem [#allocation6], %s293
        %p295 = pneg %p57
        %p296 = pneg %p54
        %p297 = pneg %p78
        %p298 = pneg %p75
        %p299 = pneg %p99
        %p300 = pneg %p96
        %p301 = pneg %p120
        %p302 = pneg %p117
        %p303 = pneg %p141
        %p304 = pneg %p138
        %p305 = pneg %p162
        %p306 = pneg %p159
        %p307 = pneg %p190
        %p308 = pneg %p187
        %s309 = sand.u32 %s177, 1
        %s310 = scalar_lea.sflag [#allocation8], %s309
        %s311 = sand.u32 %s177, 1
        %s312 = smul.addr %s311, 32
        %s313 = scalar_lea.vmem [#allocation12], %s312
        %s314 = smul.u32 4, %s29
        %s315 = smul.u32 %s28, %s29
        %s316 = smul.u32 4, %s315
        %p317 = scmp.eq.s32.totalorder %s28, 0
        %p318 = scmp.eq.s32.totalorder %s29, 0
        %p319 = pnand %p317, %p318
        %p320 = pneg %p319
        // Predicated region
        $region57: #{tpu_custom_call.1} parent=43 // pred_check
          _
        $region58: #{tpu_custom_call.1} parent=43 // pred_check_branch
          %322 = sbr.rel (%p319) target = $region60
        $region59: #{tpu_custom_call.1} parent=43 // pred_region
          %323 = vst [vmem:[#allocation2] sm:$0x1] 0.0
          %324 = vst [vmem:[#allocation3] sm:$0x1] 0.0
        $region60: #{tpu_custom_call.1} parent=43 // pred_fallthru
          _
        // Predicated region
        $region61: #{tpu_custom_call.1} parent=43 // pred_check
          %p325 = pneg %p317
        $region62: #{tpu_custom_call.1} parent=43 // pred_check_branch
          %327 = sbr.rel (%p325) target = $region64
        $region63: #{tpu_custom_call.1} parent=43 // pred_region
          %v328 = vld [vmem:[%s277] sm:$0xff]
          %v329 = vld [vmem:[%s277 + $0x8] sm:$0xff]
          %v330 = vld [vmem:[%s277 + $0x10] sm:$0xff]
          %v331 = vld [vmem:[%s277 + $0x18] sm:$0xff]
          %v332 = vld [vmem:[%s277 + $0x20] sm:$0xff]
          %v333 = vld [vmem:[%s277 + $0x28] sm:$0xff]
          %v334 = vld [vmem:[%s277 + $0x30] sm:$0xff]
          %v335 = vld [vmem:[%s277 + $0x38] sm:$0xff]
          %v336 = vld [vmem:[#allocation9] sm:$0xff]
          %v337 = vld [vmem:[#allocation9 + $0x8] sm:$0xff]
          %v338 = vld [vmem:[#allocation9 + $0x10] sm:$0xff]
          %v339 = vld [vmem:[#allocation9 + $0x18] sm:$0xff]
          %v340 = vld [vmem:[#allocation9 + $0x20] sm:$0xff]
          %v341 = vld [vmem:[#allocation9 + $0x28] sm:$0xff]
          %v342 = vld [vmem:[#allocation9 + $0x30] sm:$0xff]
          %v343 = vld [vmem:[#allocation9 + $0x38] sm:$0xff]
          %v344 = vld [vmem:[#allocation9 + $0x40] sm:$0xff]
          %v345 = vld [vmem:[#allocation9 + $0x48] sm:$0xff]
          %v346 = vld [vmem:[#allocation9 + $0x50] sm:$0xff]
          %v347 = vld [vmem:[#allocation9 + $0x58] sm:$0xff]
          %v348 = vld [vmem:[#allocation9 + $0x60] sm:$0xff]
          %v349 = vld [vmem:[#allocation9 + $0x68] sm:$0xff]
          %v350 = vld [vmem:[#allocation9 + $0x70] sm:$0xff]
          %v351 = vld [vmem:[#allocation9 + $0x78] sm:$0xff]
          %v352 = vld [vmem:[#allocation9 + $0x80] sm:$0xff]
          %v353 = vld [vmem:[#allocation9 + $0x88] sm:$0xff]
          %v354 = vld [vmem:[#allocation9 + $0x90] sm:$0xff]
          %v355 = vld [vmem:[#allocation9 + $0x98] sm:$0xff]
          %v356 = vld [vmem:[#allocation9 + $0xa0] sm:$0xff]
          %v357 = vld [vmem:[#allocation9 + $0xa8] sm:$0xff]
          %v358 = vld [vmem:[#allocation9 + $0xb0] sm:$0xff]
          %v359 = vld [vmem:[#allocation9 + $0xb8] sm:$0xff]
          %v360 = vld [vmem:[#allocation9 + $0xc0] sm:$0xff]
          %v361 = vld [vmem:[#allocation9 + $0xc8] sm:$0xff]
          %v362 = vld [vmem:[#allocation9 + $0xd0] sm:$0xff]
          %v363 = vld [vmem:[#allocation9 + $0xd8] sm:$0xff]
          %v364 = vld [vmem:[#allocation9 + $0xe0] sm:$0xff]
          %v365 = vld [vmem:[#allocation9 + $0xe8] sm:$0xff]
          %v366 = vld [vmem:[#allocation9 + $0xf0] sm:$0xff]
          %v367 = vld [vmem:[#allocation9 + $0xf8] sm:$0xff]
          %368 = vmatprep.subr.mxu0 0.0
          %369 = vmatpush1.msra.mxu0 %v336
          %370 = vmatprep.subr.mxu0 0.0
          %371 = vmatpush1.msra.mxu0 %v337
          %372 = vmatprep.subr.mxu0 0.0
          %373 = vmatpush1.msra.mxu0 %v338
          %374 = vmatprep.subr.mxu0 0.0
          %375 = vmatpush1.msra.mxu0 %v339
          %376 = vmatprep.subr.mxu0 0.0
          %377 = vmatpush1.msra.mxu0 %v340
          %378 = vmatprep.subr.mxu0 0.0
          %379 = vmatpush1.msra.mxu0 %v341
          %380 = vmatprep.subr.mxu0 0.0
          %381 = vmatpush1.msra.mxu0 %v342
          %382 = vmatprep.subr.mxu0 0.0
          %383 = vmatpush1.msra.mxu0 %v343
          %384 = vmatprep.subr.mxu0 0.0
          %385 = vmatpush1.msra.mxu0 %v344
          %386 = vmatprep.subr.mxu0 0.0
          %387 = vmatpush1.msra.mxu0 %v345
          %388 = vmatprep.subr.mxu0 0.0
          %389 = vmatpush1.msra.mxu0 %v346
          %390 = vmatprep.subr.mxu0 0.0
          %391 = vmatpush1.msra.mxu0 %v347
          %392 = vmatprep.subr.mxu0 0.0
          %393 = vmatpush1.msra.mxu0 %v348
          %394 = vmatprep.subr.mxu0 0.0
          %395 = vmatpush1.msra.mxu0 %v349
          %396 = vmatprep.subr.mxu0 0.0
          %397 = vmatpush1.msra.mxu0 %v350
          %398 = vmatprep.subr.mxu0 0.0
          %399 = vmatpush1.msra.mxu0 %v351
          %400 = vmatprep.subr.mxu0 0.0
          %401 = vmatpush1.msra.mxu0 %v352
          %402 = vmatprep.subr.mxu0 0.0
          %403 = vmatpush1.msra.mxu0 %v353
          %404 = vmatprep.subr.mxu0 0.0
          %405 = vmatpush1.msra.mxu0 %v354
          %406 = vmatprep.subr.mxu0 0.0
          %407 = vmatpush1.msra.mxu0 %v355
          %408 = vmatprep.subr.mxu0 0.0
          %409 = vmatpush1.msra.mxu0 %v356
          %410 = vmatprep.subr.mxu0 0.0
          %411 = vmatpush1.msra.mxu0 %v357
          %412 = vmatprep.subr.mxu0 0.0
          %413 = vmatpush1.msra.mxu0 %v358
          %414 = vmatprep.subr.mxu0 0.0
          %415 = vmatpush1.msra.mxu0 %v359
          %416 = vmatprep.subr.mxu0 0.0
          %417 = vmatpush1.msra.mxu0 %v360
          %418 = vmatprep.subr.mxu0 0.0
          %419 = vmatpush1.msra.mxu0 %v361
          %420 = vmatprep.subr.mxu0 0.0
          %421 = vmatpush1.msra.mxu0 %v362
          %422 = vmatprep.subr.mxu0 0.0
          %423 = vmatpush1.msra.mxu0 %v363
          %424 = vmatprep.subr.mxu0 0.0
          %425 = vmatpush1.msra.mxu0 %v364
          %426 = vmatprep.subr.mxu0 0.0
          %427 = vmatpush1.msra.mxu0 %v365
          %428 = vmatprep.subr.mxu0 0.0
          %429 = vmatpush1.msra.mxu0 %v366
          %430 = vmatprep.subr.mxu0 0.0
          %431 = vmatpush1.msra.mxu0 %v367
          %432 = vmatprep.mubr.f32.mxu0 %v329
          %433 = vmatmul.mubr.f32.gmra.mrb[0].mxu0 %v328
          %v434 = vpop.f32.mrb[0].mxu0
          %v435 = vadd.f32 0.0, %v434
          %v436 = vpop.f32.mrb[0].mxu0
          %437 = vmatprep.mubr.f32.mxu0 %v331
          %438 = vmatmul.mubr.f32.gmra.mrb[0].mxu0 %v330
          %v439 = vpop.f32.mrb[0].mxu0
          %v440 = vadd.f32 0.0, %v439
          %v441 = vpop.f32.mrb[0].mxu0
          %442 = vmatprep.mubr.f32.mxu0 %v333
          %443 = vmatmul.mubr.f32.gmra.mrb[0].mxu0 %v332
          %v444 = vpop.f32.mrb[0].mxu0
          %v445 = vadd.f32 0.0, %v444
          %v446 = vpop.f32.mrb[0].mxu0
          %447 = vmatprep.mubr.f32.mxu0 %v335
          %448 = vmatmul.mubr.f32.gmra.mrb[0].mxu0 %v334
          %v449 = vpop.f32.mrb[0].mxu0
          %v450 = vadd.f32 0.0, %v449
          %v451 = vpop.f32.mrb[0].mxu0
          %452 = vdwg.mxu0
          %v453 = vld [vmem:[#allocation2] sm:$0x1]
          %v454 = vadd.f32 %v435, %v440
          %v455 = vadd.f32 %v454, %v445
          %v456 = vadd.f32 %v455, %v450
          %v457 = vrot.slane %v456, 4
          %v458 = vadd.f32 %v456, %v457
          %v459 = vrot.slane %v458, 2
          %v460 = vadd.f32 %v458, %v459
          %v461 = vrot.slane %v460, 1
          %v462 = vadd.f32 %v460, %v461
          %v463 = vadd.f32 %v453, %v462
          %464 = vst [vmem:[#allocation2] sm:$0x1] %v463
          %v465 = vld [vmem:[#allocation3] sm:$0x1]
          %v466 = vmul.f32 %v435, %v435
          %v467 = vmul.f32 %v440, %v440
          %v468 = vmul.f32 %v445, %v445
          %v469 = vmul.f32 %v450, %v450
          %v470 = vadd.f32 %v466, %v467
          %v471 = vadd.f32 %v470, %v468
          %v472 = vadd.f32 %v471, %v469
          %v473 = vrot.slane %v472, 4
          %v474 = vadd.f32 %v472, %v473
          %v475 = vrot.slane %v474, 2
          %v476 = vadd.f32 %v474, %v475
          %v477 = vrot.slane %v476, 1
          %v478 = vadd.f32 %v476, %v477
          %v479 = vadd.f32 %v465, %v478
          %480 = vst [vmem:[#allocation3] sm:$0x1] %v479
        $region64: #{tpu_custom_call.1} parent=43 // pred_fallthru
          _
        %p481 = scmp.eq.s32.totalorder %s28, 1
        %p482 = pnand %p481, %p318
        %p483 = pneg %p482
        // Predicated region
        $region65: #{tpu_custom_call.1} parent=43 // pred_check
          _
        $region66: #{tpu_custom_call.1} parent=43 // pred_check_branch
          %485 = sbr.rel (%p482) target = $region68
        $region67: #{tpu_custom_call.1} parent=43 // pred_region
          %v486 = vld [vmem:[#allocation2] sm:$0x1]
          %v487 = vmul.f32 %v486, 0.015625
          %v488 = vld [vmem:[#allocation3] sm:$0x1]
          %v489 = vmul.f32 %v488, 0.015625
          %v490 = vmul.f32 %v487, %v487
          %v491 = vsub.f32 %v489, %v490
          %v492 = vmax.f32 %v491, 0.0
          %v493 = vld [vmem:[%s2] sm:$0x1]
          %v494 = vadd.f32 %v492, 1e-05
          %v495 = vrsqrt.pop %v494
          %v496 = vmul.f32 %v493, %v495
          %497 = vst [vmem:[#allocation4] sm:$0x1] %v496
          %v498 = vld [vmem:[%s3] sm:$0x1]
          %v499 = vmul.f32 %v487, %v496
          %v500 = vsub.f32 %v498, %v499
          %501 = vst [vmem:[#allocation5] sm:$0x1] %v500
        $region68: #{tpu_custom_call.1} parent=43 // pred_fallthru
          _
        // Predicated region
        $region69: #{tpu_custom_call.1} parent=43 // pred_check
          %p502 = pneg %p481
        $region70: #{tpu_custom_call.1} parent=43 // pred_check_branch
          %504 = sbr.rel (%p502) target = $region72
        $region71: #{tpu_custom_call.1} parent=43 // pred_region
          %v505 = vld [vmem:[%s277] sm:$0xff]
          %v506 = vld [vmem:[%s277 + $0x8] sm:$0xff]
          %v507 = vld [vmem:[%s277 + $0x10] sm:$0xff]
          %v508 = vld [vmem:[%s277 + $0x18] sm:$0xff]
          %v509 = vld [vmem:[%s277 + $0x20] sm:$0xff]
          %v510 = vld [vmem:[%s277 + $0x28] sm:$0xff]
          %v511 = vld [vmem:[%s277 + $0x30] sm:$0xff]
          %v512 = vld [vmem:[%s277 + $0x38] sm:$0xff]
          %v513 = vld [vmem:[#allocation9] sm:$0xff]
          %v514 = vld [vmem:[#allocation9 + $0x8] sm:$0xff]
          %v515 = vld [vmem:[#allocation9 + $0x10] sm:$0xff]
          %v516 = vld [vmem:[#allocation9 + $0x18] sm:$0xff]
          %v517 = vld [vmem:[#allocation9 + $0x20] sm:$0xff]
          %v518 = vld [vmem:[#allocation9 + $0x28] sm:$0xff]
          %v519 = vld [vmem:[#allocation9 + $0x30] sm:$0xff]
          %v520 = vld [vmem:[#allocation9 + $0x38] sm:$0xff]
          %v521 = vld [vmem:[#allocation9 + $0x40] sm:$0xff]
          %v522 = vld [vmem:[#allocation9 + $0x48] sm:$0xff]
          %v523 = vld [vmem:[#allocation9 + $0x50] sm:$0xff]
          %v524 = vld [vmem:[#allocation9 + $0x58] sm:$0xff]
          %v525 = vld [vmem:[#allocation9 + $0x60] sm:$0xff]
          %v526 = vld [vmem:[#allocation9 + $0x68] sm:$0xff]
          %v527 = vld [vmem:[#allocation9 + $0x70] sm:$0xff]
          %v528 = vld [vmem:[#allocation9 + $0x78] sm:$0xff]
          %v529 = vld [vmem:[#allocation9 + $0x80] sm:$0xff]
          %v530 = vld [vmem:[#allocation9 + $0x88] sm:$0xff]
          %v531 = vld [vmem:[#allocation9 + $0x90] sm:$0xff]
          %v532 = vld [vmem:[#allocation9 + $0x98] sm:$0xff]
          %v533 = vld [vmem:[#allocation9 + $0xa0] sm:$0xff]
          %v534 = vld [vmem:[#allocation9 + $0xa8] sm:$0xff]
          %v535 = vld [vmem:[#allocation9 + $0xb0] sm:$0xff]
          %v536 = vld [vmem:[#allocation9 + $0xb8] sm:$0xff]
          %v537 = vld [vmem:[#allocation9 + $0xc0] sm:$0xff]
          %v538 = vld [vmem:[#allocation9 + $0xc8] sm:$0xff]
          %v539 = vld [vmem:[#allocation9 + $0xd0] sm:$0xff]
          %v540 = vld [vmem:[#allocation9 + $0xd8] sm:$0xff]
          %v541 = vld [vmem:[#allocation9 + $0xe0] sm:$0xff]
          %v542 = vld [vmem:[#allocation9 + $0xe8] sm:$0xff]
          %v543 = vld [vmem:[#allocation9 + $0xf0] sm:$0xff]
          %v544 = vld [vmem:[#allocation9 + $0xf8] sm:$0xff]
          %545 = vmatprep.subr.mxu0 0.0
          %546 = vmatpush1.msra.mxu0 %v513
          %547 = vmatprep.subr.mxu0 0.0
          %548 = vmatpush1.msra.mxu0 %v514
          %549 = vmatprep.subr.mxu0 0.0
          %550 = vmatpush1.msra.mxu0 %v515
          %551 = vmatprep.subr.mxu0 0.0
          %552 = vmatpush1.msra.mxu0 %v516
          %553 = vmatprep.subr.mxu0 0.0
          %554 = vmatpush1.msra.mxu0 %v517
          %555 = vmatprep.subr.mxu0 0.0
          %556 = vmatpush1.msra.mxu0 %v518
          %557 = vmatprep.subr.mxu0 0.0
          %558 = vmatpush1.msra.mxu0 %v519
          %559 = vmatprep.subr.mxu0 0.0
          %560 = vmatpush1.msra.mxu0 %v520
          %561 = vmatprep.subr.mxu0 0.0
          %562 = vmatpush1.msra.mxu0 %v521
          %563 = vmatprep.subr.mxu0 0.0
          %564 = vmatpush1.msra.mxu0 %v522
          %565 = vmatprep.subr.mxu0 0.0
          %566 = vmatpush1.msra.mxu0 %v523
          %567 = vmatprep.subr.mxu0 0.0
          %568 = vmatpush1.msra.mxu0 %v524
          %569 = vmatprep.subr.mxu0 0.0
          %570 = vmatpush1.msra.mxu0 %v525
          %571 = vmatprep.subr.mxu0 0.0
          %572 = vmatpush1.msra.mxu0 %v526
          %573 = vmatprep.subr.mxu0 0.0
          %574 = vmatpush1.msra.mxu0 %v527
          %575 = vmatprep.subr.mxu0 0.0
          %576 = vmatpush1.msra.mxu0 %v528
          %577 = vmatprep.subr.mxu0 0.0
          %578 = vmatpush1.msra.mxu0 %v529
          %579 = vmatprep.subr.mxu0 0.0
          %580 = vmatpush1.msra.mxu0 %v530
          %581 = vmatprep.subr.mxu0 0.0
          %582 = vmatpush1.msra.mxu0 %v531
          %583 = vmatprep.subr.mxu0 0.0
          %584 = vmatpush1.msra.mxu0 %v532
          %585 = vmatprep.subr.mxu0 0.0
          %586 = vmatpush1.msra.mxu0 %v533
          %587 = vmatprep.subr.mxu0 0.0
          %588 = vmatpush1.msra.mxu0 %v534
          %589 = vmatprep.subr.mxu0 0.0
          %590 = vmatpush1.msra.mxu0 %v535
          %591 = vmatprep.subr.mxu0 0.0
          %592 = vmatpush1.msra.mxu0 %v536
          %593 = vmatprep.subr.mxu0 0.0
          %594 = vmatpush1.msra.mxu0 %v537
          %595 = vmatprep.subr.mxu0 0.0
          %596 = vmatpush1.msra.mxu0 %v538
          %597 = vmatprep.subr.mxu0 0.0
          %598 = vmatpush1.msra.mxu0 %v539
          %599 = vmatprep.subr.mxu0 0.0
          %600 = vmatpush1.msra.mxu0 %v540
          %601 = vmatprep.subr.mxu0 0.0
          %602 = vmatpush1.msra.mxu0 %v541
          %603 = vmatprep.subr.mxu0 0.0
          %604 = vmatpush1.msra.mxu0 %v542
          %605 = vmatprep.subr.mxu0 0.0
          %606 = vmatpush1.msra.mxu0 %v543
          %607 = vmatprep.subr.mxu0 0.0
          %608 = vmatpush1.msra.mxu0 %v544
          %609 = vmatprep.mubr.f32.mxu0 %v506
          %610 = vmatmul.mubr.f32.gmra.mrb[0].mxu0 %v505
          %v611 = vpop.f32.mrb[0].mxu0
          %v612 = vadd.f32 0.0, %v611
          %v613 = vpop.f32.mrb[0].mxu0
          %614 = vmatprep.mubr.f32.mxu0 %v508
          %615 = vmatmul.mubr.f32.gmra.mrb[0].mxu0 %v507
          %v616 = vpop.f32.mrb[0].mxu0
          %v617 = vadd.f32 0.0, %v616
          %v618 = vpop.f32.mrb[0].mxu0
          %619 = vmatprep.mubr.f32.mxu0 %v510
          %620 = vmatmul.mubr.f32.gmra.mrb[0].mxu0 %v509
          %v621 = vpop.f32.mrb[0].mxu0
          %v622 = vadd.f32 0.0, %v621
          %v623 = vpop.f32.mrb[0].mxu0
          %624 = vmatprep.mubr.f32.mxu0 %v512
          %625 = vmatmul.mubr.f32.gmra.mrb[0].mxu0 %v511
          %v626 = vpop.f32.mrb[0].mxu0
          %v627 = vadd.f32 0.0, %v626
          %v628 = vpop.f32.mrb[0].mxu0
          %629 = vdwg.mxu0
          %v630 = vld [vmem:[#allocation4] sm:$0x1]
          %v632 = vlaneseq
          %v633 = vshrl.u32 %v632, 7
          %v634 = vsub.s32 0, %v633
          %v635 = vrot.slane %v630, %v634
          %v637 = vmul.f32 %v612, %v635
          %v638 = vmul.f32 %v617, %v635
          %v639 = vmul.f32 %v622, %v635
          %v640 = vmul.f32 %v627, %v635
          %v641 = vld [vmem:[#allocation5] sm:$0x1]
          %v643 = vlaneseq
          %v644 = vshrl.u32 %v643, 7
          %v645 = vsub.s32 0, %v644
          %v646 = vrot.slane %v641, %v645
          %v648 = vadd.f32 %v637, %v646
          %v649 = vadd.f32 %v638, %v646
          %v650 = vadd.f32 %v639, %v646
          %v651 = vadd.f32 %v640, %v646
          %vm652 = vcmp.ge.f32.partialorder %v648, 0.0
          %vm653 = vcmp.ge.f32.partialorder %v649, 0.0
          %vm654 = vcmp.ge.f32.partialorder %v650, 0.0
          %vm655 = vcmp.ge.f32.partialorder %v651, 0.0
          %v656 = vmul.f32 %v648, 0.2
          %v657 = vmul.f32 %v649, 0.2
          %v658 = vmul.f32 %v650, 0.2
          %v659 = vmul.f32 %v651, 0.2
          %v660 = vsel %vm652, %v648, %v656
          %v661 = vsel %vm653, %v649, %v657
          %v662 = vsel %vm654, %v650, %v658
          %v663 = vsel %vm655, %v651, %v659
          %v664 = vld [vmem:[#allocation11] sm:$0xff]
          %v665 = vld [vmem:[#allocation11 + $0x8] sm:$0xff]
          %v666 = vld [vmem:[#allocation11 + $0x10] sm:$0xff]
          %v667 = vld [vmem:[#allocation11 + $0x18] sm:$0xff]
          %v668 = vld [vmem:[#allocation11 + $0x20] sm:$0xff]
          %v669 = vld [vmem:[#allocation11 + $0x28] sm:$0xff]
          %v670 = vld [vmem:[#allocation11 + $0x30] sm:$0xff]
          %v671 = vld [vmem:[#allocation11 + $0x38] sm:$0xff]
          %v672 = vld [vmem:[#allocation11 + $0x40] sm:$0xff]
          %v673 = vld [vmem:[#allocation11 + $0x48] sm:$0xff]
          %v674 = vld [vmem:[#allocation11 + $0x50] sm:$0xff]
          %v675 = vld [vmem:[#allocation11 + $0x58] sm:$0xff]
          %v676 = vld [vmem:[#allocation11 + $0x60] sm:$0xff]
          %v677 = vld [vmem:[#allocation11 + $0x68] sm:$0xff]
          %v678 = vld [vmem:[#allocation11 + $0x70] sm:$0xff]
          %v679 = vld [vmem:[#allocation11 + $0x78] sm:$0xff]
          %v680 = vld [vmem:[%s5] sm:$0x1]
          %v682 = vlaneseq
          %v683 = vshrl.u32 %v682, 7
          %v684 = vsub.s32 0, %v683
          %v685 = vrot.slane %v680, %v684
          %687 = vmatprep.subr.mxu0 0.0
          %688 = vmatpush1.msra.mxu0 %v664
          %689 = vmatprep.subr.mxu0 0.0
          %690 = vmatpush1.msra.mxu0 %v665
          %691 = vmatprep.subr.mxu0 0.0
          %692 = vmatpush1.msra.mxu0 %v666
          %693 = vmatprep.subr.mxu0 0.0
          %694 = vmatpush1.msra.mxu0 %v667
          %695 = vmatprep.subr.mxu0 0.0
          %696 = vmatpush1.msra.mxu0 %v668
          %697 = vmatprep.subr.mxu0 0.0
          %698 = vmatpush1.msra.mxu0 %v669
          %699 = vmatprep.subr.mxu0 0.0
          %700 = vmatpush1.msra.mxu0 %v670
          %701 = vmatprep.subr.mxu0 0.0
          %702 = vmatpush1.msra.mxu0 %v671
          %703 = vmatprep.subr.mxu0 0.0
          %704 = vmatpush1.msra.mxu0 %v672
          %705 = vmatprep.subr.mxu0 0.0
          %706 = vmatpush1.msra.mxu0 %v673
          %707 = vmatprep.subr.mxu0 0.0
          %708 = vmatpush1.msra.mxu0 %v674
          %709 = vmatprep.subr.mxu0 0.0
          %710 = vmatpush1.msra.mxu0 %v675
          %711 = vmatprep.subr.mxu0 0.0
          %712 = vmatpush1.msra.mxu0 %v676
          %713 = vmatprep.subr.mxu0 0.0
          %714 = vmatpush1.msra.mxu0 %v677
          %715 = vmatprep.subr.mxu0 0.0
          %716 = vmatpush1.msra.mxu0 %v678
          %717 = vmatprep.subr.mxu0 0.0
          %718 = vmatpush1.msra.mxu0 %v679
          %719 = vmatprep.subr.mxu0 0.0
          %720 = vmatpush1.msra.mxu0 0.0
          %721 = vmatprep.subr.mxu0 0.0
          %722 = vmatpush1.msra.mxu0 0.0
          %723 = vmatprep.subr.mxu0 0.0
          %724 = vmatpush1.msra.mxu0 0.0
          %725 = vmatprep.subr.mxu0 0.0
          %726 = vmatpush1.msra.mxu0 0.0
          %727 = vmatprep.subr.mxu0 0.0
          %728 = vmatpush1.msra.mxu0 0.0
          %729 = vmatprep.subr.mxu0 0.0
          %730 = vmatpush1.msra.mxu0 0.0
          %731 = vmatprep.subr.mxu0 0.0
          %732 = vmatpush1.msra.mxu0 0.0
          %733 = vmatprep.subr.mxu0 0.0
          %734 = vmatpush1.msra.mxu0 0.0
          %735 = vmatprep.subr.mxu0 0.0
          %736 = vmatpush1.msra.mxu0 0.0
          %737 = vmatprep.subr.mxu0 0.0
          %738 = vmatpush1.msra.mxu0 0.0
          %739 = vmatprep.subr.mxu0 0.0
          %740 = vmatpush1.msra.mxu0 0.0
          %741 = vmatprep.subr.mxu0 0.0
          %742 = vmatpush1.msra.mxu0 0.0
          %743 = vmatprep.subr.mxu0 0.0
          %744 = vmatpush1.msra.mxu0 0.0
          %745 = vmatprep.subr.mxu0 0.0
          %746 = vmatpush1.msra.mxu0 0.0
          %747 = vmatprep.subr.mxu0 0.0
          %748 = vmatpush1.msra.mxu0 0.0
          %749 = vmatprep.subr.mxu0 0.0
          %750 = vmatpush1.msra.mxu0 0.0
          %751 = vmatprep.mubr.f32.mxu0 0.0
          %752 = vmatmul.mubr.f32.gmra.mrb[0].mxu0 %v660
          %v753 = vpop.f32.mrb[0].mxu0
          %v754 = vadd.f32 %v685, %v753
          %v755 = vpop.f32.mrb[0].mxu0
          %756 = vmatprep.mubr.f32.mxu0 0.0
          %757 = vmatmul.mubr.f32.gmra.mrb[0].mxu0 %v661
          %v758 = vpop.f32.mrb[0].mxu0
          %v759 = vadd.f32 %v685, %v758
          %v760 = vpop.f32.mrb[0].mxu0
          %761 = vmatprep.mubr.f32.mxu0 0.0
          %762 = vmatmul.mubr.f32.gmra.mrb[0].mxu0 %v662
          %v763 = vpop.f32.mrb[0].mxu0
          %v764 = vadd.f32 %v685, %v763
          %v765 = vpop.f32.mrb[0].mxu0
          %766 = vmatprep.mubr.f32.mxu0 0.0
          %767 = vmatmul.mubr.f32.gmra.mrb[0].mxu0 %v663
          %v768 = vpop.f32.mrb[0].mxu0
          %v769 = vadd.f32 %v685, %v768
          %v770 = vpop.f32.mrb[0].mxu0
          %771 = vdwg.mxu0
          %772 = vst [vmem:[%s313] sm:$0xff] %v754
          %773 = vst [vmem:[%s313 + $0x8] sm:$0xff] %v759
          %774 = vst [vmem:[%s313 + $0x10] sm:$0xff] %v764
          %775 = vst [vmem:[%s313 + $0x18] sm:$0xff] %v769
        $region72: #{tpu_custom_call.1} parent=43 // pred_fallthru
          _
        %s776 = sand.u32 %s177, 1
        %s777 = scalar_lea.sflag [#allocation8], %s776
        %s778 = sand.u32 %s177, 1
        %s779 = smul.addr %s778, 32
        %s780 = scalar_lea.vmem [#allocation12], %s779
        // Predicated region
        $region73: #{tpu_custom_call.1} parent=43 // pred_check
          %p781 = pneg %p187
        $region74: #{tpu_custom_call.1} parent=43 // pred_check_branch
          %783 = sbr.rel (%p781) target = $region76
        $region75: #{tpu_custom_call.1} parent=43 // pred_region
          %s784 = smul.u32 %s28, %s29
          %s785 = smul.u32 4, %s784
          %s787 = ssub.s32 512, 512
          %788 = vsyncadd %s777, %s787
          %s789 = smul.addr %s785, 128
          %s790 = scalar_lea.hbm %s6, %s789
          %s791 = sshll.u32 %s780, 4
          %s792 = int_to_ptr.vmem [resolvable:$true] %s791
          %797 = dma.vmem_to_hbm [thread:$0]  %s792, 512, %s790, %s777, 128, 128, 8
        $region76: #{tpu_custom_call.1} parent=43 // pred_fallthru
          _
      $region44: #{tpu_custom_call.1} parent=5 // pred_fallthru
        _
      %p798 = scmp.le.s32.totalorder 2, %s19
      // Predicated region
      $region77: #{tpu_custom_call.1} parent=5 // pred_check
        %p799 = pneg %p798
      $region78: #{tpu_custom_call.1} parent=5 // pred_check_branch
        %801 = sbr.rel (%p799) target = $region80
      $region79: #{tpu_custom_call.1} parent=5 // pred_region
        %s802 = ssub.s32 %s19, 2
        // Predicated region
        $region81: #{tpu_custom_call.1} parent=79 // pred_check
          %p803 = pneg %p193
        $region82: #{tpu_custom_call.1} parent=79 // pred_check_branch
          %805 = sbr.rel (%p803) target = $region84
        $region83: #{tpu_custom_call.1} parent=79 // pred_region
          %s806 = sand.u32 %s178, 1
          %s807 = scalar_lea.sflag [#allocation8], %s806
          %s808 = sand.u32 %s178, 1
          %s809 = smul.addr %s808, 32
          %s810 = scalar_lea.vmem [#allocation12], %s809
          %811 = dma.done %s807, 512
        $region84: #{tpu_custom_call.1} parent=79 // pred_fallthru
          _
      $region80: #{tpu_custom_call.1} parent=5 // pred_fallthru
        _
    $region6: #{tpu_custom_call.1} parent=1 // loop_footer
      %s23 = sadd.s32 1, %s19
    $region7: #{tpu_custom_call.1} parent=1 // loop_footer_branch
      %18 = sbr.rel target = $region3
    $region8: #{tpu_custom_call.1} parent=1 // loop_exit
      _
    %812 = vsyncpa [#allocation7], 1
    %s813 = scalar_lea.sflag [#allocation7], 1
    %814 = vsyncpa %s813, 1
    %815 = vsyncpa [#allocation10], 1
    %816 = vsyncpa [#allocation8], 1
    %s817 = scalar_lea.sflag [#allocation8], 1
    %818 = vsyncpa %s817, 1

</llo_original>
